<compile_context>
chip_gen: v5e
topology: v5e:2x2
jax: 0.10.0
libtpu: 0.0.40
codegen_flags: <defaults>
</compile_context>

<pallas_src>
import functools

import jax
import jax.numpy as jnp
from jax import lax
from jax.experimental import pallas as pl
from jax.experimental.pallas import tpu as pltpu

IGNORE_INDEX = -100  # nn.NLLLoss default


def _choose_tile_p(hw, c):
    """Pick a lane-dense pixel tile (multiple of 128) that fits VMEM safely."""
    if hw <= 128:
        return hw  # full extent (allowed: equals the full array dim)
    budget = 2 * 1024 * 1024                 # bytes for ONE logits block
    max_by_vmem = max(128, budget // (c * 4))  # (x2 double-buffered by Pallas)
    tile = min(hw, 8192, max_by_vmem)
    return max(128, (tile // 128) * 128)


def _focal_kernel(*refs, gamma, ignore_index, hw, tile_p, has_weight):
    if has_weight:
        x_ref, t_ref, w_ref, sum_out_ref, cnt_out_ref, sum_acc, cnt_acc = refs
    else:
        x_ref, t_ref, sum_out_ref, cnt_out_ref, sum_acc, cnt_acc = refs
        w_ref = None

    j = pl.program_id(1)

    @pl.when(j == 0)
    def _():
        sum_acc[...] = jnp.zeros_like(sum_acc)
        cnt_acc[...] = jnp.zeros_like(cnt_acc)

    x = x_ref[0].astype(jnp.float32)   # (C, tile_p)  logits, pixels on lanes
    t = t_ref[0]                       # (1, tile_p)  int32 labels

    # one-hot of the target class via sublane iota (no dynamic gather)
    cls = lax.broadcasted_iota(jnp.int32, x.shape, 0)   # (C, tile_p)
    onehot = cls == t                                   # (C, tile_p)

    # numerically-stable log-softmax at the target class (sublane reductions)
    m = jnp.max(x, axis=0, keepdims=True)                               # (1, tile_p)
    lse = m + jnp.log(jnp.sum(jnp.exp(x - m), axis=0, keepdims=True))   # (1, tile_p)
    picked = jnp.sum(jnp.where(onehot, x, 0.0), axis=0, keepdims=True)  # (1, tile_p)
    logp_t = picked - lse                                               # <= 0
    p_t = jnp.exp(logp_t)
    penalty = jnp.maximum(1.0 - p_t, 0.0) ** gamma

    # mask: in-bounds pixels of this tile AND not ignore_index
    col = lax.broadcasted_iota(jnp.int32, t.shape, 1)    # (1, tile_p)
    in_bounds = (j * tile_p + col) < hw
    valid = jnp.logical_and(in_bounds, t != ignore_index)

    if has_weight:
        w = w_ref[...].astype(jnp.float32)                               # (C, 1)
        w_pix = jnp.sum(jnp.where(onehot, w, 0.0), axis=0, keepdims=True)
    else:
        w_pix = jnp.ones_like(p_t)

    loss_pix = jnp.where(valid, -(w_pix * penalty * logp_t), 0.0)
    den_pix = jnp.where(valid, w_pix, 0.0)

    # lane-dense VPU-only accumulation; no per-step cross-lane reduce
    sum_acc[...] += loss_pix
    cnt_acc[...] += den_pix

    @pl.when(j == pl.num_programs(1) - 1)
    def _():
        sum_out_ref[0] = sum_acc[...]
        cnt_out_ref[0] = cnt_acc[...]


def focal_loss_2d(inputs, targets, gamma=2, weight=None,
                  ignore_index=IGNORE_INDEX):
    """Pallas equivalent of FocalLoss2d.forward.

    inputs:  (N, C, H, W) float logits
    targets: (N, H, W) int labels (ignore_index pixels are skipped)
    returns scalar mean focal loss.
    """
    n, c, h, w = inputs.shape
    hw = h * w
    # Free reshapes (no transpose, no extra HBM pass): NCHW -> (N, C, HW)
    logits = inputs.reshape(n, c, hw).astype(jnp.float32)
    tgt = targets.reshape(n, 1, hw).astype(jnp.int32)

    tile_p = _choose_tile_p(hw, c)
    n_tiles = pl.cdiv(hw, tile_p)

    has_weight = weight is not None
    args = [logits, tgt]
    in_specs = [
        pl.BlockSpec((1, c, tile_p), lambda i, j: (i, 0, j)),
        pl.BlockSpec((1, 1, tile_p), lambda i, j: (i, 0, j)),
    ]
    if has_weight:
        w_arr = jnp.asarray(weight, jnp.float32).reshape(c, 1)
        args.append(w_arr)
        in_specs.append(pl.BlockSpec((c, 1), lambda i, j: (0, 0)))

    kernel = functools.partial(
        _focal_kernel, gamma=gamma, ignore_index=ignore_index,
        hw=hw, tile_p=tile_p, has_weight=has_weight)

    sums, cnts = pl.pallas_call(
        kernel,
        out_shape=(jax.ShapeDtypeStruct((n, 1, tile_p), jnp.float32),
                   jax.ShapeDtypeStruct((n, 1, tile_p), jnp.float32)),
        grid_spec=pltpu.PrefetchScalarGridSpec(
            num_scalar_prefetch=0,
            grid=(n, n_tiles),
            in_specs=in_specs,
            out_specs=[
                pl.BlockSpec((1, 1, tile_p), lambda i, j: (i, 0, 0)),
                pl.BlockSpec((1, 1, tile_p), lambda i, j: (i, 0, 0)),
            ],
            scratch_shapes=[
                pltpu.VMEM((1, tile_p), jnp.float32),  # running loss partials
                pltpu.VMEM((1, tile_p), jnp.float32),  # running weight/count
            ],
        ),
        compiler_params=pltpu.CompilerParams(
            dimension_semantics=("parallel", "arbitrary")),
    )(*args)

    # tiny final reduction of lane-dense partials (NaN if no valid pixel,
    # matching PyTorch)
    return jnp.sum(sums) / jnp.sum(cnts)


def _reference(inputs, targets, gamma=2, weight=None,
               ignore_index=IGNORE_INDEX):
    """Pure-JAX reference mirroring the PyTorch module."""
    n, c, h, w = inputs.shape
    logp = jax.nn.log_softmax(inputs.astype(jnp.float32), axis=1)
    p = jnp.exp(logp)
    scaled = ((1.0 - p) ** gamma) * logp
    t = targets.astype(jnp.int32)
    tc = jnp.clip(t, 0, c - 1)
    picked = jnp.take_along_axis(scaled, tc[:, None, :, :], axis=1)[:, 0]
    valid = t != ignore_index
    if weight is None:
        w_pix = jnp.ones_like(picked)
    else:
        w_pix = jnp.asarray(weight, jnp.float32)[tc]
    num = jnp.sum(jnp.where(valid, -w_pix * picked, 0.0))
    den = jnp.sum(jnp.where(valid, w_pix, 0.0))
    return num / den


if __name__ == "__main__":
    key = jax.random.PRNGKey(0)
    k1, k2, k3, k4 = jax.random.split(key, 4)

    N, C, H, W = 2, 4, 16, 16
    inputs = jax.random.normal(k1, (N, C, H, W), dtype=jnp.float32)
    targets = jax.random.randint(k2, (N, H, W), 0, C).astype(jnp.int32)

    loss = jax.block_until_ready(focal_loss_2d(inputs, targets))
    ref = _reference(inputs, targets)
    assert jnp.allclose(loss, ref, atol=1e-5, rtol=1e-5), (loss, ref)

    # odd spatial size + class weights -> exercises tail-tile masking & weight path
    H2, W2 = 15, 13
    inputs2 = jax.random.normal(k3, (N, C, H2, W2), dtype=jnp.float32)
    targets2 = jax.random.randint(k4, (N, H2, W2), 0, C).astype(jnp.int32)
    cls_w = jnp.array([1.0, 2.0, 0.5, 1.5], dtype=jnp.float32)

    loss2 = jax.block_until_ready(
        focal_loss_2d(inputs2, targets2, gamma=2, weight=cls_w))
    ref2 = _reference(inputs2, targets2, gamma=2, weight=cls_w)
    assert jnp.allclose(loss2, ref2, atol=1e-5, rtol=1e-5), (loss2, ref2)

    print("KERNEL_OK")
</pallas_src>

<mosaic_0001>
module attributes {stable_mosaic.version = 11 : i64} {
  func.func @_focal_kernel(%arg0: i32, %arg1: i32, %arg2: memref<1x4x256xf32, #tpu.memory_space<vmem>>, %arg3: memref<1x1x256xi32, #tpu.memory_space<vmem>>, %arg4: memref<1x1x256xf32, #tpu.memory_space<vmem>>, %arg5: memref<1x1x256xf32, #tpu.memory_space<vmem>>, %arg6: memref<1x256xf32, #tpu.memory_space<vmem>>, %arg7: memref<1x256xf32, #tpu.memory_space<vmem>>) attributes {dimension_semantics = [#tpu.dimension_semantics<parallel>, #tpu.dimension_semantics<arbitrary>], iteration_bounds = array<i64: 2, 1>, scalar_prefetch = 0 : i64, scratch_operands = 2 : i64, tpu.core_type = #tpu.core_type<tc>, window_params = [{transform_indices = @transform_0, window_bounds = array<i64: 1, 4, 256>}, {transform_indices = @transform_1, window_bounds = array<i64: 1, 1, 256>}, {transform_indices = @transform_2, window_bounds = array<i64: 1, 1, 256>}, {transform_indices = @transform_3, window_bounds = array<i64: 1, 1, 256>}]} {
    %c0_i32 = arith.constant 0 : i32
    %0 = arith.cmpi eq, %arg1, %c0_i32 : i32
    %1 = arith.extui %0 : i1 to i32
    %c0_i32_0 = arith.constant 0 : i32
    %2 = arith.cmpi ne, %1, %c0_i32_0 : i32
    scf.if %2 {
      %cst_26 = arith.constant 0.000000e+00 : f32
      %57 = vector.broadcast %cst_26 : f32 to vector<1x256xf32>
      %c0_27 = arith.constant 0 : index
      %c0_28 = arith.constant 0 : index
      %58 = vector.load %arg6[%c0_27, %c0_28] : memref<1x256xf32, #tpu.memory_space<vmem>>, vector<1x256xf32>
      tpu.vector_store %arg6[%c0_27, %c0_28], %57 {strides = array<i32>} : memref<1x256xf32, #tpu.memory_space<vmem>>, vector<1x256xf32>,
      %cst_29 = arith.constant 0.000000e+00 : f32
      %59 = vector.broadcast %cst_29 : f32 to vector<1x256xf32>
      %c0_30 = arith.constant 0 : index
      %c0_31 = arith.constant 0 : index
      %60 = vector.load %arg7[%c0_30, %c0_31] : memref<1x256xf32, #tpu.memory_space<vmem>>, vector<1x256xf32>
      tpu.vector_store %arg7[%c0_30, %c0_31], %59 {strides = array<i32>} : memref<1x256xf32, #tpu.memory_space<vmem>>, vector<1x256xf32>,
    } else {
    }
    %c0 = arith.constant 0 : index
    %c0_1 = arith.constant 0 : index
    %c0_2 = arith.constant 0 : index
    %3 = vector.load %arg2[%c0, %c0_1, %c0_2] : memref<1x4x256xf32, #tpu.memory_space<vmem>>, vector<1x4x256xf32>
    %4 = vector.shape_cast %3 : vector<1x4x256xf32> to vector<4x256xf32>
    %c0_3 = arith.constant 0 : index
    %c0_4 = arith.constant 0 : index
    %c0_5 = arith.constant 0 : index
    %5 = vector.load %arg3[%c0_3, %c0_4, %c0_5] : memref<1x1x256xi32, #tpu.memory_space<vmem>>, vector<1x1x256xi32>
    %6 = vector.shape_cast %5 : vector<1x1x256xi32> to vector<1x256xi32>
    %7 = tpu.iota {dimensions = array<i32: 0>} : vector<4x256xi32>
    %8 = vector.broadcast %6 : vector<1x256xi32> to vector<4x256xi32>
    %9 = arith.cmpi eq, %7, %8 : vector<4x256xi32>
    %cst = arith.constant dense<0xFF800000> : vector<256xf32>
    %10 = vector.multi_reduction <maximumf>, %4, %cst [0] : vector<4x256xf32> to vector<256xf32>
    %11 = vector.shape_cast %10 : vector<256xf32> to vector<1x256xf32>
    %12 = vector.broadcast %11 : vector<1x256xf32> to vector<4x256xf32>
    %13 = arith.subf %4, %12 : vector<4x256xf32>
    %14 = math.exp %13 : vector<4x256xf32>
    %cst_6 = arith.constant dense<0.000000e+00> : vector<256xf32>
    %15 = vector.multi_reduction <add>, %14, %cst_6 [0] : vector<4x256xf32> to vector<256xf32>
    %16 = vector.shape_cast %15 : vector<256xf32> to vector<1x256xf32>
    %17 = math.log %16 : vector<1x256xf32>
    %18 = arith.addf %11, %17 : vector<1x256xf32>
    %cst_7 = arith.constant 0.000000e+00 : f32
    %19 = vector.broadcast %cst_7 : f32 to vector<4x256xf32>
    %20 = arith.select %9, %4, %19 : vector<4x256xi1>, vector<4x256xf32>
    %cst_8 = arith.constant dense<0.000000e+00> : vector<256xf32>
    %21 = vector.multi_reduction <add>, %20, %cst_8 [0] : vector<4x256xf32> to vector<256xf32>
    %22 = vector.shape_cast %21 : vector<256xf32> to vector<1x256xf32>
    %23 = arith.subf %22, %18 : vector<1x256xf32>
    %24 = math.exp %23 : vector<1x256xf32>
    %cst_9 = arith.constant 1.000000e+00 : f32
    %25 = vector.broadcast %cst_9 : f32 to vector<1x256xf32>
    %26 = arith.subf %25, %24 : vector<1x256xf32>
    %cst_10 = arith.constant 0.000000e+00 : f32
    %27 = vector.broadcast %cst_10 : f32 to vector<1x256xf32>
    %28 = arith.maximumf %26, %27 : vector<1x256xf32>
    %29 = arith.mulf %28, %28 : vector<1x256xf32>
    %30 = tpu.iota {dimensions = array<i32: 1>} : vector<1x256xi32>
    %c256_i32 = arith.constant 256 : i32
    %31 = arith.muli %arg1, %c256_i32 : i32
    %32 = vector.broadcast %31 : i32 to vector<1x256xi32>
    %33 = arith.addi %32, %30 : vector<1x256xi32>
    %c256_i32_11 = arith.constant 256 : i32
    %34 = vector.broadcast %c256_i32_11 : i32 to vector<1x256xi32>
    %35 = arith.cmpi slt, %33, %34 : vector<1x256xi32>
    %c-100_i32 = arith.constant -100 : i32
    %36 = vector.broadcast %c-100_i32 : i32 to vector<1x256xi32>
    %37 = arith.cmpi ne, %6, %36 : vector<1x256xi32>
    %38 = arith.andi %35, %37 : vector<1x256xi1>
    %cst_12 = arith.constant 1.000000e+00 : f32
    %39 = vector.broadcast %cst_12 : f32 to vector<1x256xf32>
    %40 = arith.mulf %39, %29 : vector<1x256xf32>
    %41 = arith.mulf %40, %23 : vector<1x256xf32>
    %cst_13 = arith.constant 0.000000e+00 : f32
    %42 = vector.broadcast %cst_13 : f32 to vector<1x256xf32>
    %43 = arith.subf %42, %41 : vector<1x256xf32>
    %cst_14 = arith.constant 0.000000e+00 : f32
    %44 = vector.broadcast %cst_14 : f32 to vector<1x256xf32>
    %45 = arith.select %38, %43, %44 : vector<1x256xi1>, vector<1x256xf32>
    %cst_15 = arith.constant 0.000000e+00 : f32
    %46 = vector.broadcast %cst_15 : f32 to vector<1x256xf32>
    %47 = arith.select %38, %39, %46 : vector<1x256xi1>, vector<1x256xf32>
    %c0_16 = arith.constant 0 : index
    %c0_17 = arith.constant 0 : index
    %48 = vector.load %arg6[%c0_16, %c0_17] : memref<1x256xf32, #tpu.memory_space<vmem>>, vector<1x256xf32>
    %49 = arith.addf %48, %45 : vector<1x256xf32>
    %c0_18 = arith.constant 0 : index
    %c0_19 = arith.constant 0 : index
    %50 = vector.load %arg6[%c0_18, %c0_19] : memref<1x256xf32, #tpu.memory_space<vmem>>, vector<1x256xf32>
    tpu.vector_store %arg6[%c0_18, %c0_19], %49 {strides = array<i32>} : memref<1x256xf32, #tpu.memory_space<vmem>>, vector<1x256xf32>,
    %c0_20 = arith.constant 0 : index
    %c0_21 = arith.constant 0 : index
    %51 = vector.load %arg7[%c0_20, %c0_21] : memref<1x256xf32, #tpu.memory_space<vmem>>, vector<1x256xf32>
    %52 = arith.addf %51, %47 : vector<1x256xf32>
    %c0_22 = arith.constant 0 : index
    %c0_23 = arith.constant 0 : index
    %53 = vector.load %arg7[%c0_22, %c0_23] : memref<1x256xf32, #tpu.memory_space<vmem>>, vector<1x256xf32>
    tpu.vector_store %arg7[%c0_22, %c0_23], %52 {strides = array<i32>} : memref<1x256xf32, #tpu.memory_space<vmem>>, vector<1x256xf32>,
    %c0_i32_24 = arith.constant 0 : i32
    %54 = arith.cmpi eq, %arg1, %c0_i32_24 : i32
    %55 = arith.extui %54 : i1 to i32
    %c0_i32_25 = arith.constant 0 : i32
    %56 = arith.cmpi ne, %55, %c0_i32_25 : i32
    scf.if %56 {
      %c0_26 = arith.constant 0 : index
      %c0_27 = arith.constant 0 : index
      %57 = vector.load %arg6[%c0_26, %c0_27] : memref<1x256xf32, #tpu.memory_space<vmem>>, vector<1x256xf32>
      %c0_28 = arith.constant 0 : index
      %c0_29 = arith.constant 0 : index
      %c0_30 = arith.constant 0 : index
      %58 = vector.load %arg4[%c0_28, %c0_29, %c0_30] : memref<1x1x256xf32, #tpu.memory_space<vmem>>, vector<1x1x256xf32>
      %59 = vector.shape_cast %58 : vector<1x1x256xf32> to vector<1x256xf32>
      %60 = vector.shape_cast %57 : vector<1x256xf32> to vector<1x1x256xf32>
      tpu.vector_store %arg4[%c0_28, %c0_29, %c0_30], %60 {strides = array<i32>} : memref<1x1x256xf32, #tpu.memory_space<vmem>>, vector<1x1x256xf32>,
      %c0_31 = arith.constant 0 : index
      %c0_32 = arith.constant 0 : index
      %61 = vector.load %arg7[%c0_31, %c0_32] : memref<1x256xf32, #tpu.memory_space<vmem>>, vector<1x256xf32>
      %c0_33 = arith.constant 0 : index
      %c0_34 = arith.constant 0 : index
      %c0_35 = arith.constant 0 : index
      %62 = vector.load %arg5[%c0_33, %c0_34, %c0_35] : memref<1x1x256xf32, #tpu.memory_space<vmem>>, vector<1x1x256xf32>
      %63 = vector.shape_cast %62 : vector<1x1x256xf32> to vector<1x256xf32>
      %64 = vector.shape_cast %61 : vector<1x256xf32> to vector<1x1x256xf32>
      tpu.vector_store %arg5[%c0_33, %c0_34, %c0_35], %64 {strides = array<i32>} : memref<1x1x256xf32, #tpu.memory_space<vmem>>, vector<1x1x256xf32>,
    } else {
    }
    return
  }
  func.func @transform_0(%arg0: i32, %arg1: i32) -> (i32, i32, i32) {
    %c0_i32 = arith.constant 0 : i32
    %c0_i32_0 = arith.constant 0 : i32
    return %arg0, %c0_i32, %arg1 : i32, i32, i32
  }
  func.func @transform_1(%arg0: i32, %arg1: i32) -> (i32, i32, i32) {
    %c0_i32 = arith.constant 0 : i32
    %c0_i32_0 = arith.constant 0 : i32
    return %arg0, %c0_i32, %arg1 : i32, i32, i32
  }
  func.func @transform_2(%arg0: i32, %arg1: i32) -> (i32, i32, i32) {
    %c0_i32 = arith.constant 0 : i32
    %c0_i32_0 = arith.constant 0 : i32
    %c0_i32_1 = arith.constant 0 : i32
    return %arg0, %c0_i32, %c0_i32_0 : i32, i32, i32
  }
  func.func @transform_3(%arg0: i32, %arg1: i32) -> (i32, i32, i32) {
    %c0_i32 = arith.constant 0 : i32
    %c0_i32_0 = arith.constant 0 : i32
    %c0_i32_1 = arith.constant 0 : i32
    return %arg0, %c0_i32, %c0_i32_0 : i32, i32, i32
  }
}

</mosaic_0001>

<llo_original>
// kernel: tpu_custom_call.1
$region0: #{tpu_custom_call.1}
  #allocation0 [shape = 'u32[]', space=smem, size = 0x4, offset = 0x4, fixed_abs, tag = 'smem constant byte address 0x4 - core index']
  #allocation1 [shape = 'u32[72,128]{1,0:T(1,128)}', space=vmem, size = 0x9000, scoped, tag = 'internal scratch']
  #allocation2 [shape = 'f32[1,256]{1,0:T(1,128)}', space=vmem, size = 0x400, scoped, tag = 'scratch operand']
  #allocation3 [shape = 'f32[1,256]{1,0:T(1,128)}', space=vmem, size = 0x400, scoped, tag = 'scratch operand']
  %s0 = inlined_call_operand.hbm [shape: f32[2,4,256], index: 0, kind: input, shape index: {}]
  %s1 = inlined_call_operand.hbm [shape: s32[2,1,256], index: 1, kind: input, shape index: {}]
  %s2 = inlined_call_operand.hbm [shape: f32[2,1,256], index: 2, kind: output, shape index: {0}]
  %s3 = inlined_call_operand.hbm [shape: f32[2,1,256], index: 3, kind: output, shape index: {1}]
  %4 = xla_tuple %s2, %s3
  %s5 = sld [smem:[#allocation0]]
  $region65: #{tpu_custom_call.1} parent=0
    _
  %s7 = ssub.s32 1, %s5
  %s8 = scalar_select 0, %s7, %s5
  $region1: #{tpu_custom_call.1} parent=0
    #allocation4 [shape = 'u8[8192]{0}', space=vmem, size = 0x2000, scoped, tag = 'input window, operand 0']
    #allocation5 [shape = 's32[2]{0}', space=sflag, size = 0x8, scoped, tag = 'scoped memory for tpu_custom_call.1']
    #allocation6 [shape = 's32[2]{0}', space=sflag, size = 0x8, scoped, tag = 'scoped memory for tpu_custom_call.1']
    #allocation7 [shape = 'u8[2048]{0}', space=vmem, size = 0x800, scoped, tag = 'input window, operand 1']
    #allocation8 [shape = 's32[2]{0}', space=sflag, size = 0x8, scoped, tag = 'scoped memory for tpu_custom_call.1']
    #allocation9 [shape = 'u8[2048]{0}', space=vmem, size = 0x800, scoped, tag = 'output window, operand 0']
    #allocation10 [shape = 'u8[2048]{0}', space=vmem, size = 0x800, scoped, tag = 'output window, operand 1']
    #allocation11 [shape = 's32[2]{0}', space=sflag, size = 0x8, scoped, tag = 'scoped memory for tpu_custom_call.1']
    %9 = vsyncpa [#allocation5], 0
    %s10 = scalar_lea.sflag [#allocation5], 1
    %11 = vsyncpa %s10, 0
    %12 = vsyncpa [#allocation8], 0
    %s13 = scalar_lea.sflag [#allocation8], 1
    %14 = vsyncpa %s13, 0
    %15 = vsyncpa [#allocation6], 0
    %s16 = scalar_lea.sflag [#allocation6], 1
    %17 = vsyncpa %s16, 0
    %18 = vsyncpa [#allocation11], 0
    %s19 = scalar_lea.sflag [#allocation11], 1
    %20 = vsyncpa %s19, 0
    loop: start=0, step=1, limit=4
    $region2: #{tpu_custom_call.1} parent=1 // loop_pre_header
      _
    $region3: #{tpu_custom_call.1} parent=1 // loop_header
      %s22 = sphi 0, %s26
      %p23 = scmp.ge.s32.totalorder %s22, 4
      %s29 = sphi 0, %s41
      %s30 = sphi 0, %s37
      %s31 = sphi 0, %s29
      %s32 = sphi 0, %s30
      %s33 = sphi 0, %s31
      %s34 = sphi 0, %s32
      %s46 = sphi 0, %s48
      %s49 = sphi 0, %s46
      %s50 = sphi 0, %s49
      %s66 = sphi 0, %s50
      %s74 = sphi 0, %s76
      %s77 = sphi 0, %s74
      %s78 = sphi 0, %s77
      %s94 = sphi 0, %s78
      %s100 = sphi 0, %s102
      %s103 = sphi 0, %s100
      %s104 = sphi 0, %s103
      %s120 = sphi 0, %s104
      %s126 = sphi 0, %s128
      %s129 = sphi 0, %s126
      %s130 = sphi 0, %s129
      %s146 = sphi 0, %s130
    $region4: #{tpu_custom_call.1} parent=1 // loop_header_branch
      %25 = sbr.rel (%p23) target = $region8
    $region5: #{tpu_custom_call.1} parent=1 // loop_body
      %s27 = ssub.s32 %s22, 1
      %s28 = ssub.s32 %s22, 2
      %s35 = sadd.s32 1, %s30
      %p36 = scmp.ge.s32.totalorder %s35, 1
      %s37 = scalar_select %p36, 0, %s35
      %s38 = sadd.s32 1, %s29
      %s39 = scalar_select %p36, %s38, %s29
      %p40 = scmp.ge.s32.totalorder %s39, 2
      %s41 = scalar_select %p40, 0, %s39
      %s42 = ssub.s32 %s29, %s41
      %s43 = ssub.s32 %s30, %s37
      %s44 = sor.u32 %s42, %s43
      %p45 = scmp.eq.s32.totalorder %s44, 0
      %s47 = sadd.s32 %s46, 1
      %s48 = scalar_select %p45, %s46, %s47
      %p51 = pneg %p45
      %p52 = scmp.eq.s32.totalorder %s22, 1
      %p53 = por %p51, %p52
      %p54 = scmp.ne.s32.totalorder %s46, %s49
      %p55 = scmp.eq.s32.totalorder %s22, 0
      %p56 = por %p54, %p55
      %p57 = scmp.ne.s32.totalorder %s46, %s49
      %p58 = scmp.eq.s32.totalorder %s27, 1
      %p59 = por %p57, %p58
      %p60 = scmp.ne.s32.totalorder %s49, %s50
      %p61 = scmp.eq.s32.totalorder %s27, 0
      %p62 = por %p60, %p61
      %p63 = scmp.ne.s32.totalorder %s49, %s50
      %p64 = scmp.eq.s32.totalorder %s28, 1
      %p65 = por %p63, %p64
      %p67 = scmp.ne.s32.totalorder %s50, %s66
      %p68 = scmp.eq.s32.totalorder %s28, 0
      %p69 = por %p67, %p68
      %s70 = ssub.s32 %s29, %s41
      %s71 = ssub.s32 %s30, %s37
      %s72 = sor.u32 %s70, %s71
      %p73 = scmp.eq.s32.totalorder %s72, 0
      %s75 = sadd.s32 %s74, 1
      %s76 = scalar_select %p73, %s74, %s75
      %p79 = pneg %p73
      %p80 = scmp.eq.s32.totalorder %s22, 1
      %p81 = por %p79, %p80
      %p82 = scmp.ne.s32.totalorder %s74, %s77
      %p83 = scmp.eq.s32.totalorder %s22, 0
      %p84 = por %p82, %p83
      %p85 = scmp.ne.s32.totalorder %s74, %s77
      %p86 = scmp.eq.s32.totalorder %s27, 1
      %p87 = por %p85, %p86
      %p88 = scmp.ne.s32.totalorder %s77, %s78
      %p89 = scmp.eq.s32.totalorder %s27, 0
      %p90 = por %p88, %p89
      %p91 = scmp.ne.s32.totalorder %s77, %s78
      %p92 = scmp.eq.s32.totalorder %s28, 1
      %p93 = por %p91, %p92
      %p95 = scmp.ne.s32.totalorder %s78, %s94
      %p96 = scmp.eq.s32.totalorder %s28, 0
      %p97 = por %p95, %p96
      %s98 = ssub.s32 %s29, %s41
      %p99 = scmp.eq.s32.totalorder %s98, 0
      %s101 = sadd.s32 %s100, 1
      %s102 = scalar_select %p99, %s100, %s101
      %p105 = pneg %p99
      %p106 = scmp.eq.s32.totalorder %s22, 1
      %p107 = por %p105, %p106
      %p108 = scmp.ne.s32.totalorder %s100, %s103
      %p109 = scmp.eq.s32.totalorder %s22, 0
      %p110 = por %p108, %p109
      %p111 = scmp.ne.s32.totalorder %s100, %s103
      %p112 = scmp.eq.s32.totalorder %s27, 1
      %p113 = por %p111, %p112
      %p114 = scmp.ne.s32.totalorder %s103, %s104
      %p115 = scmp.eq.s32.totalorder %s27, 0
      %p116 = por %p114, %p115
      %p117 = scmp.ne.s32.totalorder %s103, %s104
      %p118 = scmp.eq.s32.totalorder %s28, 1
      %p119 = por %p117, %p118
      %p121 = scmp.ne.s32.totalorder %s104, %s120
      %p122 = scmp.eq.s32.totalorder %s28, 0
      %p123 = por %p121, %p122
      %s124 = ssub.s32 %s29, %s41
      %p125 = scmp.eq.s32.totalorder %s124, 0
      %s127 = sadd.s32 %s126, 1
      %s128 = scalar_select %p125, %s126, %s127
      %p131 = pneg %p125
      %p132 = scmp.eq.s32.totalorder %s22, 1
      %p133 = por %p131, %p132
      %p134 = scmp.ne.s32.totalorder %s126, %s129
      %p135 = scmp.eq.s32.totalorder %s22, 0
      %p136 = por %p134, %p135
      %p137 = scmp.ne.s32.totalorder %s126, %s129
      %p138 = scmp.eq.s32.totalorder %s27, 1
      %p139 = por %p137, %p138
      %p140 = scmp.ne.s32.totalorder %s129, %s130
      %p141 = scmp.eq.s32.totalorder %s27, 0
      %p142 = por %p140, %p141
      %p143 = scmp.ne.s32.totalorder %s129, %s130
      %p144 = scmp.eq.s32.totalorder %s28, 1
      %p145 = por %p143, %p144
      %p147 = scmp.ne.s32.totalorder %s130, %s146
      %p148 = scmp.eq.s32.totalorder %s28, 0
      %p149 = por %p147, %p148
      %p150 = scmp.le.s32.totalorder 1, %s22
      %p151 = scmp.lt.s32.totalorder %s22, 3
      %p152 = pnand %p150, %p151
      %p153 = pneg %p152
      // Predicated region
      $region9: #{tpu_custom_call.1} parent=5 // pred_check
        _
      $region10: #{tpu_custom_call.1} parent=5 // pred_check_branch
        %155 = sbr.rel (%p152) target = $region12
      $region11: #{tpu_custom_call.1} parent=5 // pred_region
        %s156 = ssub.s32 %s22, 1
      $region12: #{tpu_custom_call.1} parent=5 // pred_fallthru
        _
      %p157 = scmp.lt.s32.totalorder %s22, 2
      // Predicated region
      $region13: #{tpu_custom_call.1} parent=5 // pred_check
        %p158 = pneg %p157
      $region14: #{tpu_custom_call.1} parent=5 // pred_check_branch
        %160 = sbr.rel (%p158) target = $region16
      $region15: #{tpu_custom_call.1} parent=5 // pred_region
        // Predicated region
        $region17: #{tpu_custom_call.1} parent=15 // pred_check
          %p161 = pneg %p56
        $region18: #{tpu_custom_call.1} parent=15 // pred_check_branch
          %163 = sbr.rel (%p161) target = $region20
        $region19: #{tpu_custom_call.1} parent=15 // pred_region
          %s164 = sand.u32 %s46, 1
          %s165 = scalar_lea.sflag [#allocation5], %s164
          %s166 = sand.u32 %s46, 1
          %s167 = smul.addr %s166, 8
          %s168 = scalar_lea.vmem [#allocation4], %s167
          %s169 = smul.u32 2, %s30
          %171 = vsyncadd %s165, 0
          %s172 = smul.addr %s29, 2
          %s173 = sadd.s32 %s169, %s172
          %s174 = smul.addr %s173, 4
          %s175 = scalar_lea.hbm %s0, %s174
          %s177 = sshll.u32 %s175, 4
          %s178 = int_to_ptr.hbm [resolvable:$true] %s177
          %s179 = sshll.u32 %s168, 4
          %s180 = int_to_ptr.vmem [resolvable:$true] %s179
          %182 = dma.hbm_to_vmem [thread:$0]  %s178, 128, %s180, %s165
        $region20: #{tpu_custom_call.1} parent=15 // pred_fallthru
          _
        // Predicated region
        $region21: #{tpu_custom_call.1} parent=15 // pred_check
          %p183 = pneg %p84
        $region22: #{tpu_custom_call.1} parent=15 // pred_check_branch
          %185 = sbr.rel (%p183) target = $region24
        $region23: #{tpu_custom_call.1} parent=15 // pred_region
          %s186 = sand.u32 %s74, 1
          %s187 = scalar_lea.sflag [#allocation8], %s186
          %s188 = sand.u32 %s74, 1
          %s189 = smul.addr %s188, 2
          %s190 = scalar_lea.vmem [#allocation7], %s189
          %s191 = smul.u32 2, %s30
          %193 = vsyncadd %s187, 0
          %s194 = smul.addr %s29, 2
          %s195 = sadd.s32 %s191, %s194
          %s196 = scalar_lea.hbm %s1, %s195
          %s198 = sshll.u32 %s196, 4
          %s199 = int_to_ptr.hbm [resolvable:$true] %s198
          %s200 = sshll.u32 %s190, 4
          %s201 = int_to_ptr.vmem [resolvable:$true] %s200
          %203 = dma.hbm_to_vmem [thread:$0]  %s199, 32, %s201, %s187
        $region24: #{tpu_custom_call.1} parent=15 // pred_fallthru
          _
      $region16: #{tpu_custom_call.1} parent=5 // pred_fallthru
        _
      %p204 = scmp.le.s32.totalorder 1, %s22
      %p205 = scmp.lt.s32.totalorder %s22, 3
      %p206 = pnand %p204, %p205
      %p207 = pneg %p206
      // Predicated region
      $region25: #{tpu_custom_call.1} parent=5 // pred_check
        _
      $region26: #{tpu_custom_call.1} parent=5 // pred_check_branch
        %209 = sbr.rel (%p206) target = $region28
      $region27: #{tpu_custom_call.1} parent=5 // pred_region
        %s210 = ssub.s32 %s22, 1
        %s211 = sand.u32 %s49, 1
        %s212 = scalar_lea.sflag [#allocation5], %s211
        %s213 = sand.u32 %s49, 1
        %s214 = smul.addr %s213, 8
        %s215 = scalar_lea.vmem [#allocation4], %s214
        // Predicated region
        $region29: #{tpu_custom_call.1} parent=27 // pred_check
          %p216 = pneg %p62
        $region30: #{tpu_custom_call.1} parent=27 // pred_check_branch
          %218 = sbr.rel (%p216) target = $region32
        $region31: #{tpu_custom_call.1} parent=27 // pred_region
          %220 = dma.done %s212, 128
        $region32: #{tpu_custom_call.1} parent=27 // pred_fallthru
          _
        %s221 = sand.u32 %s77, 1
        %s222 = scalar_lea.sflag [#allocation8], %s221
        %s223 = sand.u32 %s77, 1
        %s224 = smul.addr %s223, 2
        %s225 = scalar_lea.vmem [#allocation7], %s224
        // Predicated region
        $region33: #{tpu_custom_call.1} parent=27 // pred_check
          %p226 = pneg %p90
        $region34: #{tpu_custom_call.1} parent=27 // pred_check_branch
          %228 = sbr.rel (%p226) target = $region36
        $region35: #{tpu_custom_call.1} parent=27 // pred_region
          %230 = dma.done %s222, 32
        $region36: #{tpu_custom_call.1} parent=27 // pred_fallthru
          _
        %s231 = sand.u32 %s49, 1
        %s232 = scalar_lea.sflag [#allocation5], %s231
        %s233 = sand.u32 %s49, 1
        %s234 = smul.addr %s233, 8
        %s235 = scalar_lea.vmem [#allocation4], %s234
        %p236 = pneg %p62
        %p237 = pneg %p59
        %s238 = sand.u32 %s77, 1
        %s239 = scalar_lea.sflag [#allocation8], %s238
        %s240 = sand.u32 %s77, 1
        %s241 = smul.addr %s240, 2
        %s242 = scalar_lea.vmem [#allocation7], %s241
        %p243 = pneg %p90
        %p244 = pneg %p87
        %p245 = pneg %p116
        %p246 = pneg %p113
        %s247 = sand.u32 %s103, 1
        %s248 = scalar_lea.sflag [#allocation6], %s247
        %s249 = sand.u32 %s103, 1
        %s250 = smul.addr %s249, 2
        %s251 = scalar_lea.vmem [#allocation9], %s250
        %p252 = pneg %p142
        %p253 = pneg %p139
        %s254 = sand.u32 %s129, 1
        %s255 = scalar_lea.sflag [#allocation11], %s254
        %s256 = sand.u32 %s129, 1
        %s257 = smul.addr %s256, 2
        %s258 = scalar_lea.vmem [#allocation10], %s257
        %s259 = smul.u32 2, %s32
        %s260 = smul.u32 2, %s32
        %p261 = scmp.eq.s32.totalorder %s32, 0
        // Predicated region
        $region37: #{tpu_custom_call.1} parent=27 // pred_check
          %p262 = pneg %p261
        $region38: #{tpu_custom_call.1} parent=27 // pred_check_branch
          %264 = sbr.rel (%p262) target = $region40
        $region39: #{tpu_custom_call.1} parent=27 // pred_region
          %v265 = vlaneseq
          %vm266 = vcmp.ge.s32.totalorder %v265, 0
          %vm267 = vcmp.lt.s32.totalorder %v265, 256
          %vm268 = vmand %vm266, %vm267
          %269 = vst.msk [vmem:[#allocation2] sm:$0x3] %vm268, 0.0
          %270 = vst.msk [vmem:[#allocation3] sm:$0x3] %vm268, 0.0
        $region40: #{tpu_custom_call.1} parent=27 // pred_fallthru
          _
        %v271 = vld [vmem:[%s215] sm:$0xff]
        %v272 = vld [vmem:[%s225] sm:$0x3]
        %v273 = vlaneseq
        %v274 = vshrl.u32 %v273, 7
        %v275 = vperm.slane %v272, 0
        %v276 = vperm.slane %v272, 1
        %vm277 = vcmp.eq.s32.totalorder %v274, %v275
        %vm278 = vcmp.eq.s32.totalorder %v274, %v276
        %280 = vst [vmem:[#allocation1] ss:$2 sm:$0xff] %v271
        %v281 = vld.sshfl [vmem:[#allocation1] sm:$0xff pattern:$0x75316420]
        %v282 = vld.sshfl [vmem:[#allocation1 + $0x8] sm:$0xff pattern:$0x75316420]
        %vm285 = vcmask 1043456
        %v286 = vsel %vm285, %v281, -inf
        %v287 = vrot.slane %v286, 4
        %v288 = vmax.f32 %v286, %v287
        %v289 = vrot.slane %v288, 2
        %v290 = vmax.f32 %v288, %v289
        %v291 = vrot.slane %v290, 1
        %v292 = vmax.f32 %v290, %v291
        %v293 = vsel %vm285, %v282, -inf
        %v294 = vrot.slane %v293, 4
        %v295 = vmax.f32 %v293, %v294
        %v296 = vrot.slane %v295, 2
        %v297 = vmax.f32 %v295, %v296
        %v298 = vrot.slane %v297, 1
        %v299 = vmax.f32 %v297, %v298
        %v302 = vrot.slane %v299, 4
        %v303 = vsel %vm285, %v292, %v302
        %v305 = vsub.f32 %v271, %v303
        %v306 = vmul.f32 %v305, 1.442695
        %v307 = vpow.pop %v306
        %309 = vst [vmem:[#allocation1] ss:$2 sm:$0xff] %v307
        %v310 = vld.sshfl [vmem:[#allocation1] sm:$0xff pattern:$0x75316420]
        %v311 = vld.sshfl [vmem:[#allocation1 + $0x8] sm:$0xff pattern:$0x75316420]
        %v314 = vsel %vm285, %v310, 0.0
        %v315 = vrot.slane %v314, 4
        %v316 = vadd.f32 %v314, %v315
        %v317 = vrot.slane %v316, 2
        %v318 = vadd.f32 %v316, %v317
        %v319 = vrot.slane %v318, 1
        %v320 = vadd.f32 %v318, %v319
        %v321 = vsel %vm285, %v311, 0.0
        %v322 = vrot.slane %v321, 4
        %v323 = vadd.f32 %v321, %v322
        %v324 = vrot.slane %v323, 2
        %v325 = vadd.f32 %v323, %v324
        %v326 = vrot.slane %v325, 1
        %v327 = vadd.f32 %v325, %v326
        %v328 = vlog2.pop %v320
        %v329 = vmul.f32 %v328, 0.6931472
        %v330 = vlog2.pop %v327
        %v331 = vmul.f32 %v330, 0.6931472
        %v332 = vadd.f32 %v292, %v329
        %v333 = vadd.f32 %v299, %v331
        %334 = vst [vmem:[#allocation1] ss:$2 sm:$0xff] %v271
        %v335 = vld.sshfl [vmem:[#allocation1] sm:$0xff pattern:$0x75316420]
        %v336 = vld.sshfl [vmem:[#allocation1 + $0x8] sm:$0xff pattern:$0x75316420]
        %v339 = vsel %vm277, %v335, 0.0
        %v340 = vsel %vm278, %v336, 0.0
        %v341 = vsel %vm285, %v339, 0.0
        %v342 = vrot.slane %v341, 4
        %v343 = vadd.f32 %v341, %v342
        %v344 = vrot.slane %v343, 2
        %v345 = vadd.f32 %v343, %v344
        %v346 = vrot.slane %v345, 1
        %v347 = vadd.f32 %v345, %v346
        %v348 = vsel %vm285, %v340, 0.0
        %v349 = vrot.slane %v348, 4
        %v350 = vadd.f32 %v348, %v349
        %v351 = vrot.slane %v350, 2
        %v352 = vadd.f32 %v350, %v351
        %v353 = vrot.slane %v352, 1
        %v354 = vadd.f32 %v352, %v353
        %v355 = vsub.f32 %v347, %v332
        %v356 = vsub.f32 %v354, %v333
        %v357 = vmul.f32 %v355, 1.442695
        %v358 = vpow.pop %v357
        %v359 = vmul.f32 %v356, 1.442695
        %v360 = vpow.pop %v359
        %v361 = vsub.f32 1.0, %v358
        %v362 = vsub.f32 1.0, %v360
        %v363 = vmax.f32 %v361, 0.0
        %v364 = vmax.f32 %v362, 0.0
        %v365 = vmul.f32 %v363, %v363
        %v366 = vmul.f32 %v364, %v364
        %v367 = vlaneseq
        %v368 = vand.u32 %v367, 127
        %v369 = vadd.s32 %v368, 128
        %s370 = smul.u32 %s32, 256
        %v371 = vstv %s370
        %v372 = vadd.s32 %v371, %v368
        %v373 = vadd.s32 %v371, %v369
        %vm374 = vcmp.lt.s32.totalorder %v372, 256
        %vm375 = vcmp.lt.s32.totalorder %v373, 256
        %vm376 = vcmp.ne.s32.totalorder %v272, 4294967196
        %v377 = vsel %vm376, 1, 0
        %v378 = vperm.slane %v377, 0
        %v379 = vperm.slane %v377, 1
        %vm380 = vcmp.ne.s32.totalorder %v378, 0
        %vm381 = vcmp.ne.s32.totalorder %v379, 0
        %vm382 = vmand %vm374, %vm380
        %vm383 = vmand %vm375, %vm381
        %v384 = vmul.f32 %v365, %v355
        %v385 = vmul.f32 %v366, %v356
        %v386 = vsub.f32 0.0, %v384
        %v387 = vsub.f32 0.0, %v385
        %v388 = vsel %vm382, %v386, 0.0
        %v389 = vsel %vm383, %v387, 0.0
        %v390 = vsel %vm382, 1.0, 0.0
        %v391 = vsel %vm383, 1.0, 0.0
        %v392 = vld [vmem:[#allocation2] sm:$0x3]
        %v395 = vrot.slane %v389, 7
        %vm396 = vcmask 1040384
        %v397 = vsel %vm396, %v388, %v395
        %v399 = vadd.f32 %v392, %v397
        %v400 = vlaneseq
        %vm401 = vcmp.ge.s32.totalorder %v400, 0
        %vm402 = vcmp.lt.s32.totalorder %v400, 256
        %vm403 = vmand %vm401, %vm402
        %404 = vst.msk [vmem:[#allocation2] sm:$0x3] %vm403, %v399
        %v405 = vld [vmem:[#allocation3] sm:$0x3]
        %v408 = vrot.slane %v391, 7
        %v409 = vsel %vm396, %v390, %v408
        %v411 = vadd.f32 %v405, %v409
        %412 = vst.msk [vmem:[#allocation3] sm:$0x3] %vm403, %v411
        // Predicated region
        $region41: #{tpu_custom_call.1} parent=27 // pred_check
          %p413 = pneg %p261
        $region42: #{tpu_custom_call.1} parent=27 // pred_check_branch
          %415 = sbr.rel (%p413) target = $region44
        $region43: #{tpu_custom_call.1} parent=27 // pred_region
          %v416 = vld [vmem:[#allocation2] sm:$0x3]
          %417 = vst.msk [vmem:[%s251] sm:$0x3] %vm403, %v416
          %v418 = vld [vmem:[#allocation3] sm:$0x3]
          %419 = vst.msk [vmem:[%s258] sm:$0x3] %vm403, %v418
        $region44: #{tpu_custom_call.1} parent=27 // pred_fallthru
          _
        %s420 = sand.u32 %s103, 1
        %s421 = scalar_lea.sflag [#allocation6], %s420
        %s422 = sand.u32 %s103, 1
        %s423 = smul.addr %s422, 2
        %s424 = scalar_lea.vmem [#allocation9], %s423
        %s425 = sand.u32 %s129, 1
        %s426 = scalar_lea.sflag [#allocation11], %s425
        %s427 = sand.u32 %s129, 1
        %s428 = smul.addr %s427, 2
        %s429 = scalar_lea.vmem [#allocation10], %s428
        // Predicated region
        $region45: #{tpu_custom_call.1} parent=27 // pred_check
          %p430 = pneg %p113
        $region46: #{tpu_custom_call.1} parent=27 // pred_check_branch
          %432 = sbr.rel (%p430) target = $region48
        $region47: #{tpu_custom_call.1} parent=27 // pred_region
          %434 = vsyncadd %s421, 0
          %s435 = smul.addr %s31, 2
          %s436 = scalar_lea.hbm %s2, %s435
          %s438 = sshll.u32 %s424, 4
          %s439 = int_to_ptr.vmem [resolvable:$true] %s438
          %s440 = sshll.u32 %s436, 4
          %s441 = int_to_ptr.hbm [resolvable:$true] %s440
          %443 = dma.vmem_to_hbm [thread:$0]  %s439, 32, %s441, %s421
        $region48: #{tpu_custom_call.1} parent=27 // pred_fallthru
          _
        // Predicated region
        $region49: #{tpu_custom_call.1} parent=27 // pred_check
          %p444 = pneg %p139
        $region50: #{tpu_custom_call.1} parent=27 // pred_check_branch
          %446 = sbr.rel (%p444) target = $region52
        $region51: #{tpu_custom_call.1} parent=27 // pred_region
          %448 = vsyncadd %s426, 0
          %s449 = smul.addr %s31, 2
          %s450 = scalar_lea.hbm %s3, %s449
          %s452 = sshll.u32 %s429, 4
          %s453 = int_to_ptr.vmem [resolvable:$true] %s452
          %s454 = sshll.u32 %s450, 4
          %s455 = int_to_ptr.hbm [resolvable:$true] %s454
          %457 = dma.vmem_to_hbm [thread:$0]  %s453, 32, %s455, %s426
        $region52: #{tpu_custom_call.1} parent=27 // pred_fallthru
          _
      $region28: #{tpu_custom_call.1} parent=5 // pred_fallthru
        _
      %p458 = scmp.le.s32.totalorder 2, %s22
      // Predicated region
      $region53: #{tpu_custom_call.1} parent=5 // pred_check
        %p459 = pneg %p458
      $region54: #{tpu_custom_call.1} parent=5 // pred_check_branch
        %461 = sbr.rel (%p459) target = $region56
      $region55: #{tpu_custom_call.1} parent=5 // pred_region
        %s462 = ssub.s32 %s22, 2
        // Predicated region
        $region57: #{tpu_custom_call.1} parent=55 // pred_check
          %p463 = pneg %p119
        $region58: #{tpu_custom_call.1} parent=55 // pred_check_branch
          %465 = sbr.rel (%p463) target = $region60
        $region59: #{tpu_custom_call.1} parent=55 // pred_region
          %s466 = sand.u32 %s104, 1
          %s467 = scalar_lea.sflag [#allocation6], %s466
          %s468 = sand.u32 %s104, 1
          %s469 = smul.addr %s468, 2
          %s470 = scalar_lea.vmem [#allocation9], %s469
          %472 = dma.done %s467, 32
        $region60: #{tpu_custom_call.1} parent=55 // pred_fallthru
          _
        // Predicated region
        $region61: #{tpu_custom_call.1} parent=55 // pred_check
          %p473 = pneg %p145
        $region62: #{tpu_custom_call.1} parent=55 // pred_check_branch
          %475 = sbr.rel (%p473) target = $region64
        $region63: #{tpu_custom_call.1} parent=55 // pred_region
          %s476 = sand.u32 %s130, 1
          %s477 = scalar_lea.sflag [#allocation11], %s476
          %s478 = sand.u32 %s130, 1
          %s479 = smul.addr %s478, 2
          %s480 = scalar_lea.vmem [#allocation10], %s479
          %482 = dma.done %s477, 32
        $region64: #{tpu_custom_call.1} parent=55 // pred_fallthru
          _
      $region56: #{tpu_custom_call.1} parent=5 // pred_fallthru
        _
    $region6: #{tpu_custom_call.1} parent=1 // loop_footer
      %s26 = sadd.s32 1, %s22
    $region7: #{tpu_custom_call.1} parent=1 // loop_footer_branch
      %21 = sbr.rel target = $region3
    $region8: #{tpu_custom_call.1} parent=1 // loop_exit
      _
    %483 = vsyncpa [#allocation5], 1
    %s484 = scalar_lea.sflag [#allocation5], 1
    %485 = vsyncpa %s484, 1
    %486 = vsyncpa [#allocation8], 1
    %s487 = scalar_lea.sflag [#allocation8], 1
    %488 = vsyncpa %s487, 1
    %489 = vsyncpa [#allocation6], 1
    %s490 = scalar_lea.sflag [#allocation6], 1
    %491 = vsyncpa %s490, 1
    %492 = vsyncpa [#allocation11], 1
    %s493 = scalar_lea.sflag [#allocation11], 1
    %494 = vsyncpa %s493, 1

</llo_original>
